<compile_context>
chip_gen: v6e
topology: v6e:2x2x1
jax: 0.10.0
libtpu: 0.0.40
codegen_flags: <defaults>
</compile_context>

<pallas_src>
import jax
import jax.numpy as jnp
from jax import lax
from jax.experimental import pallas as pl
from jax.experimental.pallas import tpu as pltpu

_NEG_INF = -1e30  # finite "minus infinity" (avoids inf arithmetic on masked lanes)


def _round_up(x, m):
    return ((x + m - 1) // m) * m


def _vmem_capacity_bytes():
    """Physical VMEM per core; conservative (v7x-sized) fallback if unknown."""
    try:
        info = pltpu.get_tpu_info()
        cap = getattr(info, "vmem_capacity_bytes", None)
        if cap:
            return int(cap)
    except Exception:
        pass
    return 64 * 1024 * 1024


def _make_nplm_kernel(num_v_tiles, block_v, valid_v, tb):
    """Kernel for grid = (2 * num_v_tiles, num_b_tiles).

    Axis 0 (s): streamed vocab axis.  s in [0, nv) = pass 1 (online max/sum-exp),
    s in [nv, 2*nv) = pass 2 (write log-probs).  Axis 1 (b): batch tile; the
    hidden activations and stats for every B-tile stay resident in VMEM scratch
    indexed by b, so W2 is streamed only twice per call in total.
    """
    needs_mask = (num_v_tiles * block_v) != valid_v
    last_tile_base = (num_v_tiles - 1) * block_v

    def kernel(x_ref, w1_ref, b1_ref, w2_ref, out_ref, h_ref, m_ref, l_ref):
        s = pl.program_id(0)   # streamed vocab step (two passes)
        b = pl.program_id(1)   # batch-tile id

        # ---- Once per B-tile (first streamed step): hidden layer + stat init.
        @pl.when(s == 0)
        def _():
            # hidden = tanh(x @ W1^T + b1); W1 kept in its PyTorch (H, F) layout.
            pre = lax.dot_general(
                x_ref[...], w1_ref[...], (((1,), (1,)), ((), ())),
                preferred_element_type=jnp.float32)            # (tb, Hp) f32
            h = jnp.tanh(pre + b1_ref[...])
            h_ref[b] = h.astype(jnp.bfloat16)                   # bf16 MXU operand
            m_ref[b] = jnp.full((tb, 1), _NEG_INF, jnp.float32)
            l_ref[b] = jnp.zeros((tb, 1), jnp.float32)

        # ---- Every step: logits for this vocab tile (pass 2 recomputes them;
        #      with the V-outer layout that costs one extra W2 stream in total).
        logits = lax.dot_general(
            h_ref[b], w2_ref[...], (((1,), (1,)), ((), ())),
            preferred_element_type=jnp.float32)                 # (tb, tv) f32

        def pass1_update(lg):
            m_old = m_ref[b]
            m_new = jnp.maximum(m_old, jnp.max(lg, axis=-1, keepdims=True))
            l_ref[b] = (jnp.exp(m_old - m_new) * l_ref[b]
                        + jnp.sum(jnp.exp(lg - m_new), axis=-1, keepdims=True))
            m_ref[b] = m_new

        if needs_mask:
            # Only the last vocab tile has padded columns -> mask only there.
            @pl.when(s < num_v_tiles - 1)
            def _():
                pass1_update(logits)

            @pl.when(s == num_v_tiles - 1)
            def _():
                col = lax.broadcasted_iota(jnp.int32, logits.shape, 1) + last_tile_base
                pass1_update(jnp.where(col < valid_v, logits, _NEG_INF))
        else:
            @pl.when(s < num_v_tiles)
            def _():
                pass1_update(logits)

        # ---- Fold lse = m + log(l) exactly once per B-tile.
        @pl.when(s == num_v_tiles)
        def _():
            m_ref[b] = m_ref[b] + jnp.log(l_ref[b])

        # ---- Pass 2: write log-probabilities for this vocab tile.
        #      (Padded vocab columns are unmasked here: they only affect output
        #      columns that are sliced off in the wrapper.)
        @pl.when(s >= num_v_tiles)
        def _():
            out_ref[...] = logits - m_ref[b]

    return kernel


def nplm_prepare(embedding, w1, b1, w2, *, block_v=2048):
    """One-time weight prep: f32->bf16 cast + 128-padding, hoisted out of the
    per-call path (the per-call W2 cast/pad was a full extra W2-sized HBM pass).
    block_v is fixed here because W2's vocab padding depends on it; pick block_v
    so it divides the vocab size when possible (removes both the in-kernel
    padding mask and the output slice)."""
    V, E = embedding.shape
    H, F = w1.shape
    assert w2.shape == (V, H) and b1.shape == (H,)
    Fp = _round_up(F, 128)
    Hp = _round_up(H, 128)
    tv = min(_round_up(block_v, 128), _round_up(V, 128))
    Vp = _round_up(V, tv)
    return dict(
        emb=embedding.astype(jnp.bfloat16),
        w1=jnp.zeros((Hp, Fp), jnp.bfloat16).at[:H, :F].set(w1.astype(jnp.bfloat16)),
        b1=jnp.zeros((1, Hp), jnp.float32).at[0, :H].set(b1.astype(jnp.float32)),
        w2=jnp.zeros((Vp, Hp), jnp.bfloat16).at[:V, :H].set(w2.astype(jnp.bfloat16)),
        V=V, E=E, H=H, F=F, Fp=Fp, Hp=Hp, tv=tv, Vp=Vp)


def _nplm_chunk(x, p, tb, vmem_limit):
    """Run the kernel on one batch chunk.  x: (B, F) bf16 flattened embeddings."""
    B = x.shape[0]
    F, Fp, Hp, tv, Vp, V = p["F"], p["Fp"], p["Hp"], p["tv"], p["Vp"], p["V"]
    Bp = _round_up(B, tb)
    nb = Bp // tb
    nv = Vp // tv

    x_p = jnp.zeros((Bp, Fp), jnp.bfloat16).at[:B, :F].set(x)

    kernel = _make_nplm_kernel(nv, tv, V, tb)
    grid = (2 * nv, nb)   # streamed-W2 axis outer, batch-tile axis inner

    grid_spec = pltpu.PrefetchScalarGridSpec(
        num_scalar_prefetch=0,
        grid=grid,
        in_specs=[
            # x: only read at s == 0; the index pins to block 0 afterwards so no
            # re-DMA is issued on later streamed steps.
            pl.BlockSpec((tb, Fp), lambda s, b: (jnp.where(s == 0, b, 0), 0)),
            # W1 / b1: resident (block index never changes).
            pl.BlockSpec((Hp, Fp), lambda s, b: (0, 0)),
            pl.BlockSpec((1, Hp), lambda s, b: (0, 0)),
            # W2: one vocab tile per streamed step; constant across the inner
            # batch axis, so it is DMA'd 2 * num_v_tiles times per call total,
            # independent of the number of B-tiles.
            pl.BlockSpec((tv, Hp), lambda s, b: (s % nv, 0)),
        ],
        # During pass 1 nothing is written: pin the block index at (0, 0) so no
        # garbage write-back traffic is generated; pass 2 walks (b, v) blocks,
        # writing each exactly once.  (Do NOT multi-buffer this spec.)
        out_specs=pl.BlockSpec(
            (tb, tv),
            lambda s, b: (jnp.where(s < nv, 0, b), jnp.maximum(s - nv, 0))),
        scratch_shapes=[
            pltpu.VMEM((nb, tb, Hp), jnp.bfloat16),  # hidden acts, whole chunk
            pltpu.VMEM((nb, tb, 1), jnp.float32),    # running max -> lse
            pltpu.VMEM((nb, tb, 1), jnp.float32),    # running sum-exp
        ],
    )

    out = pl.pallas_call(
        kernel,
        out_shape=jax.ShapeDtypeStruct((Bp, Vp), jnp.float32),
        grid_spec=grid_spec,
        compiler_params=pltpu.CompilerParams(
            # The batch axis is data-parallel but trailing after the V-outer
            # restructure; keep both axes "arbitrary" for portability.
            # TODO(synk): explicit per-core batch split (leading core axis /
            # pl.core_map) to recover megacore sharding on v7x.
            dimension_semantics=("arbitrary", "arbitrary"),
            vmem_limit_bytes=vmem_limit,
        ),
    )(x_p, p["w1"], p["b1"], p["w2"])

    if Bp != B:
        out = out[:B]
    if Vp != V:
        out = out[:, :V]
    return out


def nplm_forward_prepared(tokens, p, *, block_b=512):
    """NPLM forward with prepared (pre-cast / pre-padded) parameters.

    tokens: (B, context) int32.  Returns (B, vocab) f32 log-probabilities."""
    B, C = tokens.shape
    F = C * p["E"]
    assert F == p["F"], "context_size * embedding_dim mismatch with prepared w1"

    # Embedding gather + flatten (nn.Embedding + .view) as cheap bf16 XLA glue.
    # TODO(synk): fuse the gather into the kernel via scalar-prefetched token
    # indices + DMA gather; W2 remains the dominant HBM stream at realistic
    # vocab sizes so the gather stays outside for now.
    x = jnp.take(p["emb"], tokens, axis=0).reshape(B, F)

    Fp, Hp, tv = p["Fp"], p["Hp"], p["tv"]
    tb = min(_round_up(block_b, 16), _round_up(B, 16))

    # Per-generation VMEM budget: ~100 MiB on v5e/v6e (128 MiB physical),
    # ~51 MiB on v7x (64 MiB physical), ~51 MiB on unknown hardware.
    budget = min(int(_vmem_capacity_bytes() * 0.8), 100 * 1024 * 1024)

    # Fixed VMEM cost (double-buffered blocks + f32 logits temporaries)...
    fixed = (2 * tv * Hp * 2 + 2 * tb * Fp * 2 + 2 * Hp * Fp * 2
             + 2 * 8 * Hp * 4 + 2 * tb * tv * 4 + 2 * tb * tv * 4)
    # ...plus per-resident-row cost (bf16 hidden scratch + lane-padded f32 stats).
    per_row = Hp * 2 + 2 * 128 * 4
    max_rows = max(tb, (max(budget - fixed, 0) // per_row) // tb * tb)

    outs = []
    for start in range(0, B, max_rows):
        outs.append(_nplm_chunk(x[start:start + max_rows], p, tb, budget))
    return outs[0] if len(outs) == 1 else jnp.concatenate(outs, axis=0)


def nplm_forward(tokens, embedding, w1, b1, w2, *, block_b=512, block_v=2048):
    """One-shot convenience wrapper (re-prepares weights every call; prefer
    nplm_prepare + nplm_forward_prepared when calling repeatedly)."""
    return nplm_forward_prepared(
        tokens, nplm_prepare(embedding, w1, b1, w2, block_v=block_v),
        block_b=block_b)


if __name__ == "__main__":
    vocab_size = 300
    embedding_dim = 16
    context_size = 4
    hidden_size = 48
    batch = 20

    key = jax.random.PRNGKey(0)
    k_emb, k_w1, k_b1, k_w2, k_tok = jax.random.split(key, 5)

    embedding = jax.random.normal(k_emb, (vocab_size, embedding_dim), jnp.float32)
    w1 = jax.random.normal(k_w1, (hidden_size, context_size * embedding_dim),
                           jnp.float32) * 0.1
    b1 = jax.random.normal(k_b1, (hidden_size,), jnp.float32) * 0.1
    w2 = jax.random.normal(k_w2, (vocab_size, hidden_size), jnp.float32) * 0.1
    tokens = jax.random.randint(k_tok, (batch, context_size), 0, vocab_size,
                                dtype=jnp.int32)

    # Pure-JAX f32 reference (kernel uses bf16 MXU operands -> loose tolerance).
    x_ref = jnp.take(embedding, tokens, axis=0).reshape(batch, -1)
    ref = jax.nn.log_softmax(jnp.tanh(x_ref @ w1.T + b1) @ w2.T, axis=1)

    def check(lp):
        lp = jax.block_until_ready(lp)
        assert lp.shape == (batch, vocab_size)
        assert bool(jnp.all(jnp.isfinite(lp)))
        max_err = float(jnp.max(jnp.abs(lp - ref)))
        assert max_err < 5e-2, f"max abs error {max_err}"
        row_lse = jax.scipy.special.logsumexp(lp, axis=1)  # rows must normalize
        assert bool(jnp.allclose(row_lse, 0.0, atol=1e-3)), "rows not normalized"

    # 1) Small tiles: exercises multiple B-tiles (with batch padding), multiple
    #    streamed vocab tiles and the padded-vocab mask (grid = (6, 2)).
    params_small = nplm_prepare(embedding, w1, b1, w2, block_v=128)
    check(nplm_forward_prepared(tokens, params_small, block_b=16))

    # 2) Production-style defaults via the one-shot wrapper: single streamed
    #    vocab tile / single B-tile path at these toy shapes.
    check(nplm_forward(tokens, embedding, w1, b1, w2))

    print("KERNEL_OK")
</pallas_src>

<mosaic_0001>
module attributes {stable_mosaic.version = 11 : i64} {
  func.func @kernel(%arg0: i32, %arg1: i32, %arg2: memref<16x128xbf16, #tpu.memory_space<vmem>>, %arg3: memref<128x128xbf16, #tpu.memory_space<vmem>>, %arg4: memref<1x128xf32, #tpu.memory_space<vmem>>, %arg5: memref<128x128xbf16, #tpu.memory_space<vmem>>, %arg6: memref<16x128xf32, #tpu.memory_space<vmem>>, %arg7: memref<2x16x128xbf16, #tpu.memory_space<vmem>>, %arg8: memref<2x16x1xf32, #tpu.memory_space<vmem>>, %arg9: memref<2x16x1xf32, #tpu.memory_space<vmem>>) attributes {dimension_semantics = [#tpu.dimension_semantics<arbitrary>, #tpu.dimension_semantics<arbitrary>], iteration_bounds = array<i64: 6, 2>, scalar_prefetch = 0 : i64, scratch_operands = 3 : i64, tpu.core_type = #tpu.core_type<tc>, window_params = [{transform_indices = @transform_0, window_bounds = array<i64: 16, 128>}, {pipeline_mode = #tpu.pipeline_mode<synchronous>, transform_indices = @transform_1, window_bounds = array<i64: 128, 128>}, {pipeline_mode = #tpu.pipeline_mode<synchronous>, transform_indices = @transform_2, window_bounds = array<i64: 1, 128>}, {transform_indices = @transform_3, window_bounds = array<i64: 128, 128>}, {transform_indices = @transform_4, window_bounds = array<i64: 16, 128>}]} {
    %c0_i32 = arith.constant 0 : i32
    %0 = arith.cmpi eq, %arg0, %c0_i32 : i32
    %1 = arith.extui %0 : i1 to i32
    %c0_i32_0 = arith.constant 0 : i32
    %2 = arith.cmpi ne, %1, %c0_i32_0 : i32
    scf.if %2 {
      %c0_10 = arith.constant 0 : index
      %c0_11 = arith.constant 0 : index
      %20 = vector.load %arg2[%c0_10, %c0_11] : memref<16x128xbf16, #tpu.memory_space<vmem>>, vector<16x128xbf16>
      %c0_12 = arith.constant 0 : index
      %c0_13 = arith.constant 0 : index
      %21 = vector.load %arg3[%c0_12, %c0_13] : memref<128x128xbf16, #tpu.memory_space<vmem>>, vector<128x128xbf16>
      %cst_14 = arith.constant dense<0.000000e+00> : vector<16x128xf32>
      %22 = tpu.matmul %20, %21, %cst_14 {dimension_numbers = #tpu.dot_dimension_numbers<[1], [1], [0], [0], [0, 0, 1, 0], [], []>} : vector<16x128xbf16>, vector<128x128xbf16>, vector<16x128xf32> -> vector<16x128xf32>
      %c0_15 = arith.constant 0 : index
      %c0_16 = arith.constant 0 : index
      %23 = vector.load %arg4[%c0_15, %c0_16] : memref<1x128xf32, #tpu.memory_space<vmem>>, vector<1x128xf32>
      %24 = vector.broadcast %23 : vector<1x128xf32> to vector<16x128xf32>
      %25 = arith.addf %22, %24 : vector<16x128xf32>
      %26 = math.tanh %25 : vector<16x128xf32>
      %27 = arith.truncf %26 : vector<16x128xf32> to vector<16x128xbf16>
      %28 = arith.index_cast %arg1 : i32 to index
      %c0_17 = arith.constant 0 : index
      %c0_18 = arith.constant 0 : index
      %29 = vector.load %arg7[%28, %c0_17, %c0_18] : memref<2x16x128xbf16, #tpu.memory_space<vmem>>, vector<1x16x128xbf16>
      %30 = vector.shape_cast %29 : vector<1x16x128xbf16> to vector<16x128xbf16>
      %31 = vector.shape_cast %27 : vector<16x128xbf16> to vector<1x16x128xbf16>
      tpu.vector_store %arg7[%28, %c0_17, %c0_18], %31 {strides = array<i32>} : memref<2x16x128xbf16, #tpu.memory_space<vmem>>, vector<1x16x128xbf16>,
      %cst_19 = arith.constant -1.000000e+30 : f32
      %32 = vector.broadcast %cst_19 : f32 to vector<16x1xf32>
      %33 = arith.index_cast %arg1 : i32 to index
      %c0_20 = arith.constant 0 : index
      %c0_21 = arith.constant 0 : index
      %34 = vector.load %arg8[%33, %c0_20, %c0_21] : memref<2x16x1xf32, #tpu.memory_space<vmem>>, vector<1x16x1xf32>
      %35 = vector.shape_cast %34 : vector<1x16x1xf32> to vector<16x1xf32>
      %36 = vector.shape_cast %32 : vector<16x1xf32> to vector<1x16x1xf32>
      tpu.vector_store %arg8[%33, %c0_20, %c0_21], %36 {strides = array<i32>} : memref<2x16x1xf32, #tpu.memory_space<vmem>>, vector<1x16x1xf32>,
      %cst_22 = arith.constant 0.000000e+00 : f32
      %37 = vector.broadcast %cst_22 : f32 to vector<16x1xf32>
      %38 = arith.index_cast %arg1 : i32 to index
      %c0_23 = arith.constant 0 : index
      %c0_24 = arith.constant 0 : index
      %39 = vector.load %arg9[%38, %c0_23, %c0_24] : memref<2x16x1xf32, #tpu.memory_space<vmem>>, vector<1x16x1xf32>
      %40 = vector.shape_cast %39 : vector<1x16x1xf32> to vector<16x1xf32>
      %41 = vector.shape_cast %37 : vector<16x1xf32> to vector<1x16x1xf32>
      tpu.vector_store %arg9[%38, %c0_23, %c0_24], %41 {strides = array<i32>} : memref<2x16x1xf32, #tpu.memory_space<vmem>>, vector<1x16x1xf32>,
    } else {
    }
    %3 = arith.index_cast %arg1 : i32 to index
    %c0 = arith.constant 0 : index
    %c0_1 = arith.constant 0 : index
    %4 = vector.load %arg7[%3, %c0, %c0_1] : memref<2x16x128xbf16, #tpu.memory_space<vmem>>, vector<1x16x128xbf16>
    %5 = vector.shape_cast %4 : vector<1x16x128xbf16> to vector<16x128xbf16>
    %c0_2 = arith.constant 0 : index
    %c0_3 = arith.constant 0 : index
    %6 = vector.load %arg5[%c0_2, %c0_3] : memref<128x128xbf16, #tpu.memory_space<vmem>>, vector<128x128xbf16>
    %cst = arith.constant dense<0.000000e+00> : vector<16x128xf32>
    %7 = tpu.matmul %5, %6, %cst {dimension_numbers = #tpu.dot_dimension_numbers<[1], [1], [0], [0], [0, 0, 1, 0], [], []>} : vector<16x128xbf16>, vector<128x128xbf16>, vector<16x128xf32> -> vector<16x128xf32>
    %c2_i32 = arith.constant 2 : i32
    %8 = arith.cmpi slt, %arg0, %c2_i32 : i32
    %9 = arith.extui %8 : i1 to i32
    %c0_i32_4 = arith.constant 0 : i32
    %10 = arith.cmpi ne, %9, %c0_i32_4 : i32
    scf.if %10 {
      %20 = arith.index_cast %arg1 : i32 to index
      %c0_10 = arith.constant 0 : index
      %c0_11 = arith.constant 0 : index
      %21 = vector.load %arg8[%20, %c0_10, %c0_11] : memref<2x16x1xf32, #tpu.memory_space<vmem>>, vector<1x16x1xf32>
      %22 = vector.shape_cast %21 : vector<1x16x1xf32> to vector<16x1xf32>
      %cst_12 = arith.constant dense<0xFF800000> : vector<16xf32>
      %23 = vector.multi_reduction <maximumf>, %7, %cst_12 [1] : vector<16x128xf32> to vector<16xf32>
      %24 = vector.shape_cast %23 : vector<16xf32> to vector<16x1xf32>
      %25 = arith.maximumf %22, %24 : vector<16x1xf32>
      %26 = arith.subf %22, %25 : vector<16x1xf32>
      %27 = math.exp %26 : vector<16x1xf32>
      %28 = arith.index_cast %arg1 : i32 to index
      %c0_13 = arith.constant 0 : index
      %c0_14 = arith.constant 0 : index
      %29 = vector.load %arg9[%28, %c0_13, %c0_14] : memref<2x16x1xf32, #tpu.memory_space<vmem>>, vector<1x16x1xf32>
      %30 = vector.shape_cast %29 : vector<1x16x1xf32> to vector<16x1xf32>
      %31 = arith.mulf %27, %30 : vector<16x1xf32>
      %32 = vector.broadcast %25 : vector<16x1xf32> to vector<16x128xf32>
      %33 = arith.subf %7, %32 : vector<16x128xf32>
      %34 = math.exp %33 : vector<16x128xf32>
      %cst_15 = arith.constant dense<0.000000e+00> : vector<16xf32>
      %35 = vector.multi_reduction <add>, %34, %cst_15 [1] : vector<16x128xf32> to vector<16xf32>
      %36 = vector.shape_cast %35 : vector<16xf32> to vector<16x1xf32>
      %37 = arith.addf %31, %36 : vector<16x1xf32>
      %38 = arith.index_cast %arg1 : i32 to index
      %c0_16 = arith.constant 0 : index
      %c0_17 = arith.constant 0 : index
      %39 = vector.load %arg9[%38, %c0_16, %c0_17] : memref<2x16x1xf32, #tpu.memory_space<vmem>>, vector<1x16x1xf32>
      %40 = vector.shape_cast %39 : vector<1x16x1xf32> to vector<16x1xf32>
      %41 = vector.shape_cast %37 : vector<16x1xf32> to vector<1x16x1xf32>
      tpu.vector_store %arg9[%38, %c0_16, %c0_17], %41 {strides = array<i32>} : memref<2x16x1xf32, #tpu.memory_space<vmem>>, vector<1x16x1xf32>,
      %42 = arith.index_cast %arg1 : i32 to index
      %c0_18 = arith.constant 0 : index
      %c0_19 = arith.constant 0 : index
      %43 = vector.load %arg8[%42, %c0_18, %c0_19] : memref<2x16x1xf32, #tpu.memory_space<vmem>>, vector<1x16x1xf32>
      %44 = vector.shape_cast %43 : vector<1x16x1xf32> to vector<16x1xf32>
      %45 = vector.shape_cast %25 : vector<16x1xf32> to vector<1x16x1xf32>
      tpu.vector_store %arg8[%42, %c0_18, %c0_19], %45 {strides = array<i32>} : memref<2x16x1xf32, #tpu.memory_space<vmem>>, vector<1x16x1xf32>,
    } else {
    }
    %c2_i32_5 = arith.constant 2 : i32
    %11 = arith.cmpi eq, %arg0, %c2_i32_5 : i32
    %12 = arith.extui %11 : i1 to i32
    %c0_i32_6 = arith.constant 0 : i32
    %13 = arith.cmpi ne, %12, %c0_i32_6 : i32
    scf.if %13 {
      %20 = tpu.iota {dimensions = array<i32: 1>} : vector<16x128xi32>
      %c256_i32 = arith.constant 256 : i32
      %21 = vector.broadcast %c256_i32 : i32 to vector<16x128xi32>
      %22 = arith.addi %20, %21 : vector<16x128xi32>
      %c300_i32 = arith.constant 300 : i32
      %23 = vector.broadcast %c300_i32 : i32 to vector<16x128xi32>
      %24 = arith.cmpi slt, %22, %23 : vector<16x128xi32>
      %cst_10 = arith.constant -1.000000e+30 : f32
      %25 = vector.broadcast %cst_10 : f32 to vector<16x128xf32>
      %26 = arith.select %24, %7, %25 : vector<16x128xi1>, vector<16x128xf32>
      %27 = arith.index_cast %arg1 : i32 to index
      %c0_11 = arith.constant 0 : index
      %c0_12 = arith.constant 0 : index
      %28 = vector.load %arg8[%27, %c0_11, %c0_12] : memref<2x16x1xf32, #tpu.memory_space<vmem>>, vector<1x16x1xf32>
      %29 = vector.shape_cast %28 : vector<1x16x1xf32> to vector<16x1xf32>
      %cst_13 = arith.constant dense<0xFF800000> : vector<16xf32>
      %30 = vector.multi_reduction <maximumf>, %26, %cst_13 [1] : vector<16x128xf32> to vector<16xf32>
      %31 = vector.shape_cast %30 : vector<16xf32> to vector<16x1xf32>
      %32 = arith.maximumf %29, %31 : vector<16x1xf32>
      %33 = arith.subf %29, %32 : vector<16x1xf32>
      %34 = math.exp %33 : vector<16x1xf32>
      %35 = arith.index_cast %arg1 : i32 to index
      %c0_14 = arith.constant 0 : index
      %c0_15 = arith.constant 0 : index
      %36 = vector.load %arg9[%35, %c0_14, %c0_15] : memref<2x16x1xf32, #tpu.memory_space<vmem>>, vector<1x16x1xf32>
      %37 = vector.shape_cast %36 : vector<1x16x1xf32> to vector<16x1xf32>
      %38 = arith.mulf %34, %37 : vector<16x1xf32>
      %39 = vector.broadcast %32 : vector<16x1xf32> to vector<16x128xf32>
      %40 = arith.subf %26, %39 : vector<16x128xf32>
      %41 = math.exp %40 : vector<16x128xf32>
      %cst_16 = arith.constant dense<0.000000e+00> : vector<16xf32>
      %42 = vector.multi_reduction <add>, %41, %cst_16 [1] : vector<16x128xf32> to vector<16xf32>
      %43 = vector.shape_cast %42 : vector<16xf32> to vector<16x1xf32>
      %44 = arith.addf %38, %43 : vector<16x1xf32>
      %45 = arith.index_cast %arg1 : i32 to index
      %c0_17 = arith.constant 0 : index
      %c0_18 = arith.constant 0 : index
      %46 = vector.load %arg9[%45, %c0_17, %c0_18] : memref<2x16x1xf32, #tpu.memory_space<vmem>>, vector<1x16x1xf32>
      %47 = vector.shape_cast %46 : vector<1x16x1xf32> to vector<16x1xf32>
      %48 = vector.shape_cast %44 : vector<16x1xf32> to vector<1x16x1xf32>
      tpu.vector_store %arg9[%45, %c0_17, %c0_18], %48 {strides = array<i32>} : memref<2x16x1xf32, #tpu.memory_space<vmem>>, vector<1x16x1xf32>,
      %49 = arith.index_cast %arg1 : i32 to index
      %c0_19 = arith.constant 0 : index
      %c0_20 = arith.constant 0 : index
      %50 = vector.load %arg8[%49, %c0_19, %c0_20] : memref<2x16x1xf32, #tpu.memory_space<vmem>>, vector<1x16x1xf32>
      %51 = vector.shape_cast %50 : vector<1x16x1xf32> to vector<16x1xf32>
      %52 = vector.shape_cast %32 : vector<16x1xf32> to vector<1x16x1xf32>
      tpu.vector_store %arg8[%49, %c0_19, %c0_20], %52 {strides = array<i32>} : memref<2x16x1xf32, #tpu.memory_space<vmem>>, vector<1x16x1xf32>,
    } else {
    }
    %c3_i32 = arith.constant 3 : i32
    %14 = arith.cmpi eq, %arg0, %c3_i32 : i32
    %15 = arith.extui %14 : i1 to i32
    %c0_i32_7 = arith.constant 0 : i32
    %16 = arith.cmpi ne, %15, %c0_i32_7 : i32
    scf.if %16 {
      %20 = arith.index_cast %arg1 : i32 to index
      %c0_10 = arith.constant 0 : index
      %c0_11 = arith.constant 0 : index
      %21 = vector.load %arg8[%20, %c0_10, %c0_11] : memref<2x16x1xf32, #tpu.memory_space<vmem>>, vector<1x16x1xf32>
      %22 = vector.shape_cast %21 : vector<1x16x1xf32> to vector<16x1xf32>
      %23 = arith.index_cast %arg1 : i32 to index
      %c0_12 = arith.constant 0 : index
      %c0_13 = arith.constant 0 : index
      %24 = vector.load %arg9[%23, %c0_12, %c0_13] : memref<2x16x1xf32, #tpu.memory_space<vmem>>, vector<1x16x1xf32>
      %25 = vector.shape_cast %24 : vector<1x16x1xf32> to vector<16x1xf32>
      %26 = math.log %25 : vector<16x1xf32>
      %27 = arith.addf %22, %26 : vector<16x1xf32>
      %28 = arith.index_cast %arg1 : i32 to index
      %c0_14 = arith.constant 0 : index
      %c0_15 = arith.constant 0 : index
      %29 = vector.load %arg8[%28, %c0_14, %c0_15] : memref<2x16x1xf32, #tpu.memory_space<vmem>>, vector<1x16x1xf32>
      %30 = vector.shape_cast %29 : vector<1x16x1xf32> to vector<16x1xf32>
      %31 = vector.shape_cast %27 : vector<16x1xf32> to vector<1x16x1xf32>
      tpu.vector_store %arg8[%28, %c0_14, %c0_15], %31 {strides = array<i32>} : memref<2x16x1xf32, #tpu.memory_space<vmem>>, vector<1x16x1xf32>,
    } else {
    }
    %c3_i32_8 = arith.constant 3 : i32
    %17 = arith.cmpi sge, %arg0, %c3_i32_8 : i32
    %18 = arith.extui %17 : i1 to i32
    %c0_i32_9 = arith.constant 0 : i32
    %19 = arith.cmpi ne, %18, %c0_i32_9 : i32
    scf.if %19 {
      %20 = arith.index_cast %arg1 : i32 to index
      %c0_10 = arith.constant 0 : index
      %c0_11 = arith.constant 0 : index
      %21 = vector.load %arg8[%20, %c0_10, %c0_11] : memref<2x16x1xf32, #tpu.memory_space<vmem>>, vector<1x16x1xf32>
      %22 = vector.shape_cast %21 : vector<1x16x1xf32> to vector<16x1xf32>
      %23 = vector.broadcast %22 : vector<16x1xf32> to vector<16x128xf32>
      %24 = arith.subf %7, %23 : vector<16x128xf32>
      %c0_12 = arith.constant 0 : index
      %c0_13 = arith.constant 0 : index
      %25 = vector.load %arg6[%c0_12, %c0_13] : memref<16x128xf32, #tpu.memory_space<vmem>>, vector<16x128xf32>
      tpu.vector_store %arg6[%c0_12, %c0_13], %24 {strides = array<i32>} : memref<16x128xf32, #tpu.memory_space<vmem>>, vector<16x128xf32>,
    } else {
    }
    return
  }
  func.func @transform_0(%arg0: i32, %arg1: i32) -> (i32, i32) {
    %c0_i32 = arith.constant 0 : i32
    %0 = arith.cmpi eq, %arg0, %c0_i32 : i32
    %c0_i32_0 = arith.constant 0 : i32
    %1 = arith.select %0, %arg1, %c0_i32_0 : i32
    %c0_i32_1 = arith.constant 0 : i32
    %c0_i32_2 = arith.constant 0 : i32
    return %1, %c0_i32_1 : i32, i32
  }
  func.func @transform_1(%arg0: i32, %arg1: i32) -> (i32, i32) {
    %c0_i32 = arith.constant 0 : i32
    %c0_i32_0 = arith.constant 0 : i32
    %c0_i32_1 = arith.constant 0 : i32
    return %c0_i32, %c0_i32_0 : i32, i32
  }
  func.func @transform_2(%arg0: i32, %arg1: i32) -> (i32, i32) {
    %c0_i32 = arith.constant 0 : i32
    %c0_i32_0 = arith.constant 0 : i32
    %c0_i32_1 = arith.constant 0 : i32
    return %c0_i32, %c0_i32_0 : i32, i32
  }
  func.func @transform_3(%arg0: i32, %arg1: i32) -> (i32, i32) {
    %c3_i32 = arith.constant 3 : i32
    %c0_i32 = arith.constant 0 : i32
    %0 = arith.cmpi eq, %c3_i32, %c0_i32 : i32
    %c1_i32 = arith.constant 1 : i32
    %1 = arith.select %0, %c1_i32, %c3_i32 : i32
    %2 = arith.remsi %arg0, %1 : i32
    %c0_i32_0 = arith.constant 0 : i32
    %3 = arith.cmpi ne, %2, %c0_i32_0 : i32
    %c0_i32_1 = arith.constant 0 : i32
    %4 = arith.cmpi slt, %2, %c0_i32_1 : i32
    %c0_i32_2 = arith.constant 0 : i32
    %5 = arith.cmpi slt, %1, %c0_i32_2 : i32
    %6 = arith.xori %4, %5 : i1
    %7 = arith.andi %6, %3 : i1
    %8 = arith.addi %2, %1 : i32
    %9 = arith.select %7, %8, %2 : i32
    %c0_i32_3 = arith.constant 0 : i32
    %c0_i32_4 = arith.constant 0 : i32
    return %9, %c0_i32_3 : i32, i32
  }
  func.func @transform_4(%arg0: i32, %arg1: i32) -> (i32, i32) {
    %c3_i32 = arith.constant 3 : i32
    %0 = arith.cmpi slt, %arg0, %c3_i32 : i32
    %c0_i32 = arith.constant 0 : i32
    %1 = arith.select %0, %c0_i32, %arg1 : i32
    %c3_i32_0 = arith.constant 3 : i32
    %2 = arith.subi %arg0, %c3_i32_0 : i32
    %c0_i32_1 = arith.constant 0 : i32
    %3 = arith.maxsi %2, %c0_i32_1 : i32
    %c0_i32_2 = arith.constant 0 : i32
    return %1, %3 : i32, i32
  }
}

</mosaic_0001>

<llo_original>
// kernel: tpu_custom_call.1
$region0: #{tpu_custom_call.1}
  #allocation0 [shape = 'u32[]', space=smem, size = 0x4, offset = 0x4, fixed_abs, tag = 'smem constant byte address 0x4 - core index']
  #allocation1 [shape = 'u32[144,128]{1,0:T(1,128)}', space=vmem, size = 0x12000, scoped, tag = 'internal scratch']
  #allocation2 [shape = 'bf16[2,16,128]{2,1,0:T(8,128)(2,1)}', space=vmem, size = 0x2000, scoped, tag = 'scratch operand']
  #allocation3 [shape = 'f32[2,16,1]{2,1,0:T(8,128)}', space=vmem, size = 0x4000, scoped, tag = 'scratch operand']
  #allocation4 [shape = 'f32[2,16,1]{2,1,0:T(8,128)}', space=vmem, size = 0x4000, scoped, tag = 'scratch operand']
  %s0 = inlined_call_operand.hbm [shape: bf16[32,128], index: 0, kind: input, shape index: {}]
  %s1 = inlined_call_operand.hbm [shape: bf16[128,128], index: 1, kind: input, shape index: {}]
  %s2 = inlined_call_operand.vmem [shape: f32[1,128], index: 2, kind: input, shape index: {}]
  %s3 = inlined_call_operand.hbm [shape: bf16[384,128], index: 3, kind: input, shape index: {}]
  %s4 = inlined_call_operand.hbm [shape: f32[32,384], index: 4, kind: output, shape index: {}]
  %s5 = sld [smem:[#allocation0]]
  $region81: #{tpu_custom_call.1} parent=0
    _
  %s7 = ssub.s32 1, %s5
  %s8 = scalar_select 0, %s7, %s5
  $region1: #{tpu_custom_call.1} parent=0
    #allocation5 [shape = 'u8[8192]{0}', space=vmem, size = 0x2000, scoped, tag = 'input window, operand 0']
    #allocation6 [shape = 's32[2]{0}', space=sflag, size = 0x8, scoped, tag = 'scoped memory for tpu_custom_call.1']
    #allocation7 [shape = 's32[2]{0}', space=sflag, size = 0x8, scoped, tag = 'scoped memory for tpu_custom_call.1']
    #allocation8 [shape = 'u8[32768]{0}', space=vmem, size = 0x8000, scoped, tag = 'input window, operand 1, single buffered']
    #allocation9 [shape = 's32[1]{0}', space=sflag, size = 0x4, scoped, tag = 'scoped memory for tpu_custom_call.1']
    #allocation10 [shape = 'u8[65536]{0}', space=vmem, size = 0x10000, scoped, tag = 'input window, operand 3']
    #allocation11 [shape = 'u8[16384]{0}', space=vmem, size = 0x4000, scoped, tag = 'output window, operand 0']
    %9 = vsyncpa [#allocation6], 0
    %s10 = scalar_lea.sflag [#allocation6], 1
    %11 = vsyncpa %s10, 0
    %12 = vsyncpa [#allocation9], 0
    %13 = vsyncpa [#allocation7], 0
    %s14 = scalar_lea.sflag [#allocation7], 1
    %15 = vsyncpa %s14, 0
    loop: start=0, step=1, limit=14
    $region2: #{tpu_custom_call.1} parent=1 // loop_pre_header
      _
    $region3: #{tpu_custom_call.1} parent=1 // loop_header
      %s17 = sphi 0, %s21
      %p18 = scmp.ge.s32.totalorder %s17, 14
      %s24 = sphi 0, %s36
      %s25 = sphi 0, %s32
      %s26 = sphi 0, %s24
      %s27 = sphi 0, %s25
      %s28 = sphi 0, %s26
      %s29 = sphi 0, %s27
      %s43 = sphi 0, %s45
      %s46 = sphi 0, %s43
      %s47 = sphi 0, %s46
      %s63 = sphi 0, %s47
      %s67 = sphi 0, %s67
      %s69 = sphi 0, %s67
      %s70 = sphi 0, %s69
      %s84 = sphi 0, %s70
      %s88 = sphi 0, %s88
      %s90 = sphi 0, %s88
      %s91 = sphi 0, %s90
      %s105 = sphi 0, %s91
      %s137 = sphi 0, %s139
      %s140 = sphi 0, %s137
      %s141 = sphi 0, %s140
      %s157 = sphi 0, %s141
      %s175 = sphi 0, %s177
      %s178 = sphi 0, %s175
      %s179 = sphi 0, %s178
      %s195 = sphi 0, %s179
    $region4: #{tpu_custom_call.1} parent=1 // loop_header_branch
      %20 = sbr.rel (%p18) target = $region8
    $region5: #{tpu_custom_call.1} parent=1 // loop_body
      %s22 = ssub.s32 %s17, 1
      %s23 = ssub.s32 %s17, 2
      %s30 = sadd.s32 1, %s25
      %p31 = scmp.ge.s32.totalorder %s30, 2
      %s32 = scalar_select %p31, 0, %s30
      %s33 = sadd.s32 1, %s24
      %s34 = scalar_select %p31, %s33, %s24
      %p35 = scmp.ge.s32.totalorder %s34, 6
      %s36 = scalar_select %p35, 0, %s34
      %p37 = scmp.eq.s32.totalorder %s24, 0
      %s38 = scalar_select %p37, %s25, 0
      %p39 = scmp.eq.s32.totalorder %s36, 0
      %s40 = scalar_select %p39, %s32, 0
      %s41 = ssub.s32 %s38, %s40
      %p42 = scmp.eq.s32.totalorder %s41, 0
      %s44 = sadd.s32 %s43, 1
      %s45 = scalar_select %p42, %s43, %s44
      %p48 = pneg %p42
      %p49 = scmp.eq.s32.totalorder %s17, 11
      %p50 = por %p48, %p49
      %p51 = scmp.ne.s32.totalorder %s43, %s46
      %p52 = scmp.eq.s32.totalorder %s17, 0
      %p53 = por %p51, %p52
      %p54 = scmp.ne.s32.totalorder %s43, %s46
      %p55 = scmp.eq.s32.totalorder %s22, 11
      %p56 = por %p54, %p55
      %p57 = scmp.ne.s32.totalorder %s46, %s47
      %p58 = scmp.eq.s32.totalorder %s22, 0
      %p59 = por %p57, %p58
      %p60 = scmp.ne.s32.totalorder %s46, %s47
      %p61 = scmp.eq.s32.totalorder %s23, 11
      %p62 = por %p60, %p61
      %p64 = scmp.ne.s32.totalorder %s47, %s63
      %p65 = scmp.eq.s32.totalorder %s23, 0
      %p66 = por %p64, %p65
      %s68 = sadd.s32 %s67, 1
      %p71 = scmp.eq.s32.totalorder %s17, 11
      %p72 = scmp.ne.s32.totalorder %s67, %s69
      %p73 = scmp.eq.s32.totalorder %s17, 0
      %p74 = por %p72, %p73
      %p75 = scmp.ne.s32.totalorder %s67, %s69
      %p76 = scmp.eq.s32.totalorder %s22, 11
      %p77 = por %p75, %p76
      %p78 = scmp.ne.s32.totalorder %s69, %s70
      %p79 = scmp.eq.s32.totalorder %s22, 0
      %p80 = por %p78, %p79
      %p81 = scmp.ne.s32.totalorder %s69, %s70
      %p82 = scmp.eq.s32.totalorder %s23, 11
      %p83 = por %p81, %p82
      %p85 = scmp.ne.s32.totalorder %s70, %s84
      %p86 = scmp.eq.s32.totalorder %s23, 0
      %p87 = por %p85, %p86
      %s89 = sadd.s32 %s88, 1
      %p92 = scmp.eq.s32.totalorder %s17, 11
      %p93 = scmp.ne.s32.totalorder %s88, %s90
      %p94 = scmp.eq.s32.totalorder %s17, 0
      %p95 = por %p93, %p94
      %p96 = scmp.ne.s32.totalorder %s88, %s90
      %p97 = scmp.eq.s32.totalorder %s22, 11
      %p98 = por %p96, %p97
      %p99 = scmp.ne.s32.totalorder %s90, %s91
      %p100 = scmp.eq.s32.totalorder %s22, 0
      %p101 = por %p99, %p100
      %p102 = scmp.ne.s32.totalorder %s90, %s91
      %p103 = scmp.eq.s32.totalorder %s23, 11
      %p104 = por %p102, %p103
      %p106 = scmp.ne.s32.totalorder %s91, %s105
      %p107 = scmp.eq.s32.totalorder %s23, 0
      %p108 = por %p106, %p107
      %p109 = scmp.lt.s32.totalorder %s24, 0
      %s110 = ssub.s32 0, %s24
      %s111 = scalar_select %p109, %s110, %s24
      %s112 = sdiv.u32.pop %s111, 3
      %s113 = srem.u32.pop %s111, 3
      %s114 = ssub.s32 0, %s113
      %s115 = scalar_select %p109, %s114, %s113
      %p116 = scmp.ne.s32.totalorder %s115, 0
      %p117 = scmp.lt.s32.totalorder %s115, 0
      %p118 = pnand %p117, %p116
      %p119 = pneg %p118
      %s120 = sadd.s32 %s115, 3
      %s121 = scalar_select %p119, %s120, %s115
      %p122 = scmp.lt.s32.totalorder %s36, 0
      %s123 = ssub.s32 0, %s36
      %s124 = scalar_select %p122, %s123, %s36
      %s125 = sdiv.u32.pop %s124, 3
      %s126 = srem.u32.pop %s124, 3
      %s127 = ssub.s32 0, %s126
      %s128 = scalar_select %p122, %s127, %s126
      %p129 = scmp.ne.s32.totalorder %s128, 0
      %p130 = scmp.lt.s32.totalorder %s128, 0
      %p131 = pnand %p130, %p129
      %p132 = pneg %p131
      %s133 = sadd.s32 %s128, 3
      %s134 = scalar_select %p132, %s133, %s128
      %s135 = ssub.s32 %s121, %s134
      %p136 = scmp.eq.s32.totalorder %s135, 0
      %s138 = sadd.s32 %s137, 1
      %s139 = scalar_select %p136, %s137, %s138
      %p142 = pneg %p136
      %p143 = scmp.eq.s32.totalorder %s17, 11
      %p144 = por %p142, %p143
      %p145 = scmp.ne.s32.totalorder %s137, %s140
      %p146 = scmp.eq.s32.totalorder %s17, 0
      %p147 = por %p145, %p146
      %p148 = scmp.ne.s32.totalorder %s137, %s140
      %p149 = scmp.eq.s32.totalorder %s22, 11
      %p150 = por %p148, %p149
      %p151 = scmp.ne.s32.totalorder %s140, %s141
      %p152 = scmp.eq.s32.totalorder %s22, 0
      %p153 = por %p151, %p152
      %p154 = scmp.ne.s32.totalorder %s140, %s141
      %p155 = scmp.eq.s32.totalorder %s23, 11
      %p156 = por %p154, %p155
      %p158 = scmp.ne.s32.totalorder %s141, %s157
      %p159 = scmp.eq.s32.totalorder %s23, 0
      %p160 = por %p158, %p159
      %p161 = scmp.lt.s32.totalorder %s24, 3
      %s162 = scalar_select %p161, 0, %s25
      %s163 = ssub.s32 %s24, 3
      %p164 = scmp.gt.s32.totalorder %s163, 0
      %s165 = scalar_select %p164, %s163, 0
      %p166 = scmp.lt.s32.totalorder %s36, 3
      %s167 = scalar_select %p166, 0, %s32
      %s168 = ssub.s32 %s36, 3
      %p169 = scmp.gt.s32.totalorder %s168, 0
      %s170 = scalar_select %p169, %s168, 0
      %s171 = ssub.s32 %s162, %s167
      %s172 = ssub.s32 %s165, %s170
      %s173 = sor.u32 %s171, %s172
      %p174 = scmp.eq.s32.totalorder %s173, 0
      %s176 = sadd.s32 %s175, 1
      %s177 = scalar_select %p174, %s175, %s176
      %p180 = pneg %p174
      %p181 = scmp.eq.s32.totalorder %s17, 11
      %p182 = por %p180, %p181
      %p183 = scmp.ne.s32.totalorder %s175, %s178
      %p184 = scmp.eq.s32.totalorder %s17, 0
      %p185 = por %p183, %p184
      %p186 = scmp.ne.s32.totalorder %s175, %s178
      %p187 = scmp.eq.s32.totalorder %s22, 11
      %p188 = por %p186, %p187
      %p189 = scmp.ne.s32.totalorder %s178, %s179
      %p190 = scmp.eq.s32.totalorder %s22, 0
      %p191 = por %p189, %p190
      %p192 = scmp.ne.s32.totalorder %s178, %s179
      %p193 = scmp.eq.s32.totalorder %s23, 11
      %p194 = por %p192, %p193
      %p196 = scmp.ne.s32.totalorder %s179, %s195
      %p197 = scmp.eq.s32.totalorder %s23, 0
      %p198 = por %p196, %p197
      %p199 = scmp.le.s32.totalorder 1, %s17
      %p200 = scmp.lt.s32.totalorder %s17, 13
      %p201 = pnand %p199, %p200
      %p202 = pneg %p201
      // Predicated region
      $region9: #{tpu_custom_call.1} parent=5 // pred_check
        _
      $region10: #{tpu_custom_call.1} parent=5 // pred_check_branch
        %204 = sbr.rel (%p201) target = $region12
      $region11: #{tpu_custom_call.1} parent=5 // pred_region
        %s205 = ssub.s32 %s17, 1
        // Predicated region
        $region13: #{tpu_custom_call.1} parent=11 // pred_check
          %p206 = pneg %p80
        $region14: #{tpu_custom_call.1} parent=11 // pred_check_branch
          %208 = sbr.rel (%p206) target = $region16
        $region15: #{tpu_custom_call.1} parent=11 // pred_region
          %s210 = ssub.s32 1024, 1024
          %211 = vsyncadd [#allocation9], %s210
          %s212 = sshll.u32 [#allocation8], 4
          %s213 = int_to_ptr.vmem [resolvable:$true] %s212
          %218 = dma.hbm_to_vmem [thread:$0]  %s1, 1024, %s213, [#allocation9], 64, 64, 4
        $region16: #{tpu_custom_call.1} parent=11 // pred_fallthru
          _
        // Predicated region
        $region17: #{tpu_custom_call.1} parent=11 // pred_check
          %p219 = pneg %p101
        $region18: #{tpu_custom_call.1} parent=11 // pred_check_branch
          %221 = sbr.rel (%p219) target = $region20
        $region19: #{tpu_custom_call.1} parent=11 // pred_region
          _
        $region20: #{tpu_custom_call.1} parent=11 // pred_fallthru
          _
      $region12: #{tpu_custom_call.1} parent=5 // pred_fallthru
        _
      %p222 = scmp.lt.s32.totalorder %s17, 12
      // Predicated region
      $region21: #{tpu_custom_call.1} parent=5 // pred_check
        %p223 = pneg %p222
      $region22: #{tpu_custom_call.1} parent=5 // pred_check_branch
        %225 = sbr.rel (%p223) target = $region24
      $region23: #{tpu_custom_call.1} parent=5 // pred_region
        // Predicated region
        $region25: #{tpu_custom_call.1} parent=23 // pred_check
          %p226 = pneg %p53
        $region26: #{tpu_custom_call.1} parent=23 // pred_check_branch
          %228 = sbr.rel (%p226) target = $region28
        $region27: #{tpu_custom_call.1} parent=23 // pred_region
          %s229 = sand.u32 %s17, 1
          %s230 = scalar_lea.sflag [#allocation6], %s229
          %s231 = sand.u32 %s43, 1
          %s232 = smul.addr %s231, 8
          %s233 = scalar_lea.vmem [#allocation5], %s232
          %p234 = scmp.eq.s32.totalorder %s24, 0
          %s235 = scalar_select %p234, %s25, 0
          %s236 = smul.u32 2, %s235
          %s238 = ssub.s32 128, 128
          %239 = vsyncadd %s230, %s238
          %s240 = smul.addr %s236, 64
          %s241 = scalar_lea.hbm %s0, %s240
          %s242 = sshll.u32 %s233, 4
          %s243 = int_to_ptr.vmem [resolvable:$true] %s242
          %248 = dma.hbm_to_vmem [thread:$0]  %s241, 128, %s243, %s230, 64, 64, 4
        $region28: #{tpu_custom_call.1} parent=23 // pred_fallthru
          _
        // Predicated region
        $region29: #{tpu_custom_call.1} parent=23 // pred_check
          %p249 = pneg %p147
        $region30: #{tpu_custom_call.1} parent=23 // pred_check_branch
          %251 = sbr.rel (%p249) target = $region32
        $region31: #{tpu_custom_call.1} parent=23 // pred_region
          %s252 = sand.u32 %s17, 1
          %s253 = scalar_lea.sflag [#allocation6], %s252
          %s254 = sand.u32 %s137, 1
          %s255 = smul.addr %s254, 64
          %s256 = scalar_lea.vmem [#allocation10], %s255
          %p257 = scmp.lt.s32.totalorder %s24, 0
          %s258 = ssub.s32 0, %s24
          %s259 = scalar_select %p257, %s258, %s24
          %s260 = sdiv.u32.pop %s259, 3
          %s261 = srem.u32.pop %s259, 3
          %s262 = ssub.s32 0, %s261
          %s263 = scalar_select %p257, %s262, %s261
          %p264 = scmp.ne.s32.totalorder %s263, 0
          %p265 = scmp.lt.s32.totalorder %s263, 0
          %p266 = pnand %p265, %p264
          %p267 = pneg %p266
          %s268 = sadd.s32 %s263, 3
          %s269 = scalar_select %p267, %s268, %s263
          %s270 = smul.u32 16, %s269
          %s272 = ssub.s32 1024, 1024
          %273 = vsyncadd %s253, %s272
          %s274 = smul.addr %s270, 64
          %s275 = scalar_lea.hbm %s3, %s274
          %s276 = sshll.u32 %s256, 4
          %s277 = int_to_ptr.vmem [resolvable:$true] %s276
          %282 = dma.hbm_to_vmem [thread:$0]  %s275, 1024, %s277, %s253, 64, 64, 4
        $region32: #{tpu_custom_call.1} parent=23 // pred_fallthru
          _
      $region24: #{tpu_custom_call.1} parent=5 // pred_fallthru
        _
      %p283 = scmp.le.s32.totalorder 1, %s17
      %p284 = scmp.lt.s32.totalorder %s17, 13
      %p285 = pnand %p283, %p284
      %p286 = pneg %p285
      // Predicated region
      $region33: #{tpu_custom_call.1} parent=5 // pred_check
        _
      $region34: #{tpu_custom_call.1} parent=5 // pred_check_branch
        %288 = sbr.rel (%p285) target = $region36
      $region35: #{tpu_custom_call.1} parent=5 // pred_region
        %s289 = ssub.s32 %s17, 1
        %s290 = sand.u32 %s22, 1
        %s291 = scalar_lea.sflag [#allocation6], %s290
        %s292 = sand.u32 %s46, 1
        %s293 = smul.addr %s292, 8
        %s294 = scalar_lea.vmem [#allocation5], %s293
        // Predicated region
        $region37: #{tpu_custom_call.1} parent=35 // pred_check
          %p295 = pneg %p59
        $region38: #{tpu_custom_call.1} parent=35 // pred_check_branch
          %297 = sbr.rel (%p295) target = $region40
        $region39: #{tpu_custom_call.1} parent=35 // pred_region
          %298 = dma.done %s291, 128
        $region40: #{tpu_custom_call.1} parent=35 // pred_fallthru
          _
        // Predicated region
        $region41: #{tpu_custom_call.1} parent=35 // pred_check
          %p299 = pneg %p80
        $region42: #{tpu_custom_call.1} parent=35 // pred_check_branch
          %301 = sbr.rel (%p299) target = $region44
        $region43: #{tpu_custom_call.1} parent=35 // pred_region
          %302 = dma.done [#allocation9], 1024
        $region44: #{tpu_custom_call.1} parent=35 // pred_fallthru
          _
        %s303 = sand.u32 %s22, 1
        %s304 = scalar_lea.sflag [#allocation6], %s303
        %s305 = sand.u32 %s140, 1
        %s306 = smul.addr %s305, 64
        %s307 = scalar_lea.vmem [#allocation10], %s306
        // Predicated region
        $region45: #{tpu_custom_call.1} parent=35 // pred_check
          %p308 = pneg %p153
        $region46: #{tpu_custom_call.1} parent=35 // pred_check_branch
          %310 = sbr.rel (%p308) target = $region48
        $region47: #{tpu_custom_call.1} parent=35 // pred_region
          %311 = dma.done %s304, 1024
        $region48: #{tpu_custom_call.1} parent=35 // pred_fallthru
          _
        %s312 = sand.u32 %s22, 1
        %s313 = scalar_lea.sflag [#allocation6], %s312
        %s314 = sand.u32 %s46, 1
        %s315 = smul.addr %s314, 8
        %s316 = scalar_lea.vmem [#allocation5], %s315
        %p317 = pneg %p59
        %p318 = pneg %p56
        %p319 = pneg %p80
        %p320 = pneg %p77
        %p321 = pneg %p101
        %p322 = pneg %p98
        %s323 = sand.u32 %s22, 1
        %s324 = scalar_lea.sflag [#allocation6], %s323
        %s325 = sand.u32 %s140, 1
        %s326 = smul.addr %s325, 64
        %s327 = scalar_lea.vmem [#allocation10], %s326
        %p328 = pneg %p153
        %p329 = pneg %p150
        %p330 = pneg %p191
        %p331 = pneg %p188
        %s332 = sand.u32 %s178, 1
        %s333 = scalar_lea.sflag [#allocation7], %s332
        %s334 = sand.u32 %s178, 1
        %s335 = smul.addr %s334, 16
        %s336 = scalar_lea.vmem [#allocation11], %s335
        %p337 = scmp.eq.s32.totalorder %s26, 0
        %s338 = scalar_select %p337, %s27, 0
        %s339 = smul.u32 2, %s338
        %p340 = scmp.lt.s32.totalorder %s26, 0
        %s341 = ssub.s32 0, %s26
        %s342 = scalar_select %p340, %s341, %s26
        %s343 = sdiv.u32.pop %s342, 3
        %s344 = srem.u32.pop %s342, 3
        %s345 = ssub.s32 0, %s344
        %s346 = scalar_select %p340, %s345, %s344
        %p347 = scmp.ne.s32.totalorder %s346, 0
        %p348 = scmp.lt.s32.totalorder %s346, 0
        %p349 = pnand %p348, %p347
        %p350 = pneg %p349
        %s351 = sadd.s32 %s346, 3
        %s352 = scalar_select %p350, %s351, %s346
        %s353 = smul.u32 16, %s352
        %p354 = scmp.lt.s32.totalorder %s26, 3
        %s355 = scalar_select %p354, 0, %s27
        %s356 = ssub.s32 %s26, 3
        %p357 = scmp.gt.s32.totalorder %s356, 0
        %s358 = scalar_select %p357, %s356, 0
        %s359 = smul.u32 2, %s355
        %p361 = scmp.eq.s32.totalorder %s26, 0
        // Predicated region
        $region49: #{tpu_custom_call.1} parent=35 // pred_check
          %p362 = pneg %p361
        $region50: #{tpu_custom_call.1} parent=35 // pred_check_branch
          %364 = sbr.rel (%p362) target = $region52
        $region51: #{tpu_custom_call.1} parent=35 // pred_region
          %v365 = vld [vmem:[%s294] sm:$0xf]
          %v366 = vld [vmem:[%s294 + $0x4] sm:$0xf]
          %v367 = vld [vmem:[#allocation8] sm:$0xf]
          %v368 = vld [vmem:[#allocation8 + $0x4] sm:$0xf]
          %v369 = vld [vmem:[#allocation8 + $0x8] sm:$0xf]
          %v370 = vld [vmem:[#allocation8 + $0xc] sm:$0xf]
          %v371 = vld [vmem:[#allocation8 + $0x10] sm:$0xf]
          %v372 = vld [vmem:[#allocation8 + $0x14] sm:$0xf]
          %v373 = vld [vmem:[#allocation8 + $0x18] sm:$0xf]
          %v374 = vld [vmem:[#allocation8 + $0x1c] sm:$0xf]
          %v375 = vld [vmem:[#allocation8 + $0x20] sm:$0xf]
          %v376 = vld [vmem:[#allocation8 + $0x24] sm:$0xf]
          %v377 = vld [vmem:[#allocation8 + $0x28] sm:$0xf]
          %v378 = vld [vmem:[#allocation8 + $0x2c] sm:$0xf]
          %v379 = vld [vmem:[#allocation8 + $0x30] sm:$0xf]
          %v380 = vld [vmem:[#allocation8 + $0x34] sm:$0xf]
          %v381 = vld [vmem:[#allocation8 + $0x38] sm:$0xf]
          %v382 = vld [vmem:[#allocation8 + $0x3c] sm:$0xf]
          %v383 = vld [vmem:[%s2] sm:$0x1]
          %v385 = vlaneseq
          %v386 = vshrl.u32 %v385, 7
          %v387 = vsub.s32 0, %v386
          %v388 = vrot.slane %v383, %v387
          %v392 = vunpack.c.l.b16 %v365
          %v393 = vunpack.c.l.b16 %v366
          %v394 = vpack.c.b16 %v393, %v392
          %v412 = vunpack.c.l.b16 %v367
          %v413 = vunpack.c.l.b16 %v368
          %v414 = vunpack.c.l.b16 %v369
          %v415 = vunpack.c.l.b16 %v370
          %v416 = vunpack.c.l.b16 %v371
          %v417 = vunpack.c.l.b16 %v372
          %v418 = vunpack.c.l.b16 %v373
          %v419 = vunpack.c.l.b16 %v374
          %v420 = vunpack.c.l.b16 %v375
          %v421 = vunpack.c.l.b16 %v376
          %v422 = vunpack.c.l.b16 %v377
          %v423 = vunpack.c.l.b16 %v378
          %v424 = vunpack.c.l.b16 %v379
          %v425 = vunpack.c.l.b16 %v380
          %v426 = vunpack.c.l.b16 %v381
          %v427 = vunpack.c.l.b16 %v382
          %v428 = vpack.c.b16 %v413, %v412
          %v429 = vpack.c.b16 %v415, %v414
          %v430 = vpack.c.b16 %v417, %v416
          %v431 = vpack.c.b16 %v419, %v418
          %v432 = vpack.c.b16 %v421, %v420
          %v433 = vpack.c.b16 %v423, %v422
          %v434 = vpack.c.b16 %v425, %v424
          %v435 = vpack.c.b16 %v427, %v426
          %444 = vmatprep.subr.bf16.mxu0 0
          %445 = vmatpush1.bf16.xpose.msra.mxu0 %v435
          %446 = vmatprep.subr.bf16.mxu0 0
          %447 = vmatpush1.bf16.xpose.msra.mxu0 %v434
          %448 = vmatprep.subr.bf16.mxu0 0
          %449 = vmatpush1.bf16.xpose.msra.mxu0 %v433
          %450 = vmatprep.subr.bf16.mxu0 0
          %451 = vmatpush1.bf16.xpose.msra.mxu0 %v432
          %452 = vmatprep.subr.bf16.mxu0 0
          %453 = vmatpush1.bf16.xpose.msra.mxu0 %v431
          %454 = vmatprep.subr.bf16.mxu0 0
          %455 = vmatpush1.bf16.xpose.msra.mxu0 %v430
          %456 = vmatprep.subr.bf16.mxu0 0
          %457 = vmatpush1.bf16.xpose.msra.mxu0 %v429
          %458 = vmatprep.subr.bf16.mxu0 0
          %459 = vmatpush1.bf16.xpose.msra.mxu0 %v428
          %460 = vmatprep.subr.bf16.mxu0 0
          %461 = vmatpush2.bf16.xpose.msra.mxu0 0
          %462 = vmatprep.subr.bf16.mxu0 0
          %463 = vmatpush2.bf16.xpose.msra.mxu0 0
          %464 = vmatprep.subr.bf16.mxu0 0
          %465 = vmatpush2.bf16.xpose.msra.mxu0 0
          %466 = vmatprep.subr.bf16.mxu0 0
          %467 = vmatpush2.bf16.xpose.msra.mxu0 0
          %468 = vmatprep.subr.bf16.mxu0 0
          %469 = vmatpush2.bf16.xpose.msra.mxu0 0
          %470 = vmatprep.subr.bf16.mxu0 0
          %471 = vmatpush2.bf16.xpose.msra.mxu0 0
          %472 = vmatprep.subr.bf16.mxu0 0
          %473 = vmatpush2.bf16.xpose.msra.mxu0 0
          %474 = vmatprep.subr.bf16.mxu0 0
          %475 = vmatpush2.bf16.xpose.msra.mxu0 0
          %476 = vmatprep.mubr.bf16.mxu0 0
          %477 = vmatmul.mubr.bf16.gmra.mxu0 %v394
          %v478 = vpop.f32.mrf.mxu0
          %v479 = vadd.f32 %v388, %v478
          %v480 = vpop.f32.mrf.mxu0
          %v481 = vpop.f32.mrf.mxu0
          %v482 = vadd.f32 %v388, %v481
          %v483 = vpop.f32.mrf.mxu0
          %484 = vdwg.mxu0
          %v485 = vtanh.pop %v479
          %v486 = vtanh.pop %v482
          %v487 = vpack.c.bf16 %v486, %v485
          %v489 = vunpack.c.l.b16 %v487
          %v490 = vunpack.c.h.b16 %v487
          %v491 = vpack.c.b16 %v489, %v489
          %v492 = vpack.c.b16 %v490, %v490
          %s495 = smul.u32 %s27, 2
          %s496 = smul.addr %s495, 4
          %s497 = scalar_lea.vmem [#allocation2], %s496
          %498 = vst [vmem:[%s497] sm:$0xf] %v491
          %499 = vst [vmem:[%s497 + $0x4] sm:$0xf] %v492
          %s500 = smul.u32 %s27, 16
          %s501 = scalar_lea.vmem [#allocation3], %s500
          %vm502 = vcmask 7168
          %503 = vst.msk [vmem:[%s501] sm:$0xff] %vm502, -1e+30
          %504 = vst.msk [vmem:[%s501 + $0x8] sm:$0xff] %vm502, -1e+30
          %s505 = scalar_lea.vmem [#allocation4], %s500
          %506 = vst.msk [vmem:[%s505] sm:$0xff] %vm502, 0.0
          %507 = vst.msk [vmem:[%s505 + $0x8] sm:$0xff] %vm502, 0.0
        $region52: #{tpu_custom_call.1} parent=35 // pred_fallthru
          _
        %s508 = smul.u32 %s27, 2
        %s509 = smul.addr %s508, 4
        %s510 = scalar_lea.vmem [#allocation2], %s509
        %v511 = vld [vmem:[%s510] sm:$0xf]
        %v512 = vld [vmem:[%s510 + $0x4] sm:$0xf]
        %v513 = vld [vmem:[%s307] sm:$0xf]
        %v514 = vld [vmem:[%s307 + $0x4] sm:$0xf]
        %v515 = vld [vmem:[%s307 + $0x8] sm:$0xf]
        %v516 = vld [vmem:[%s307 + $0xc] sm:$0xf]
        %v517 = vld [vmem:[%s307 + $0x10] sm:$0xf]
        %v518 = vld [vmem:[%s307 + $0x14] sm:$0xf]
        %v519 = vld [vmem:[%s307 + $0x18] sm:$0xf]
        %v520 = vld [vmem:[%s307 + $0x1c] sm:$0xf]
        %v521 = vld [vmem:[%s307 + $0x20] sm:$0xf]
        %v522 = vld [vmem:[%s307 + $0x24] sm:$0xf]
        %v523 = vld [vmem:[%s307 + $0x28] sm:$0xf]
        %v524 = vld [vmem:[%s307 + $0x2c] sm:$0xf]
        %v525 = vld [vmem:[%s307 + $0x30] sm:$0xf]
        %v526 = vld [vmem:[%s307 + $0x34] sm:$0xf]
        %v527 = vld [vmem:[%s307 + $0x38] sm:$0xf]
        %v528 = vld [vmem:[%s307 + $0x3c] sm:$0xf]
        %v531 = vunpack.c.l.b16 %v511
        %v532 = vunpack.c.l.b16 %v512
        %v533 = vpack.c.b16 %v532, %v531
        %v551 = vunpack.c.l.b16 %v513
        %v552 = vunpack.c.l.b16 %v514
        %v553 = vunpack.c.l.b16 %v515
        %v554 = vunpack.c.l.b16 %v516
        %v555 = vunpack.c.l.b16 %v517
        %v556 = vunpack.c.l.b16 %v518
        %v557 = vunpack.c.l.b16 %v519
        %v558 = vunpack.c.l.b16 %v520
        %v559 = vunpack.c.l.b16 %v521
        %v560 = vunpack.c.l.b16 %v522
        %v561 = vunpack.c.l.b16 %v523
        %v562 = vunpack.c.l.b16 %v524
        %v563 = vunpack.c.l.b16 %v525
        %v564 = vunpack.c.l.b16 %v526
        %v565 = vunpack.c.l.b16 %v527
        %v566 = vunpack.c.l.b16 %v528
        %v567 = vpack.c.b16 %v552, %v551
        %v568 = vpack.c.b16 %v554, %v553
        %v569 = vpack.c.b16 %v556, %v555
        %v570 = vpack.c.b16 %v558, %v557
        %v571 = vpack.c.b16 %v560, %v559
        %v572 = vpack.c.b16 %v562, %v561
        %v573 = vpack.c.b16 %v564, %v563
        %v574 = vpack.c.b16 %v566, %v565
        %583 = vmatprep.subr.bf16.mxu0 0
        %584 = vmatpush1.bf16.xpose.msra.mxu0 %v574
        %585 = vmatprep.subr.bf16.mxu0 0
        %586 = vmatpush1.bf16.xpose.msra.mxu0 %v573
        %587 = vmatprep.subr.bf16.mxu0 0
        %588 = vmatpush1.bf16.xpose.msra.mxu0 %v572
        %589 = vmatprep.subr.bf16.mxu0 0
        %590 = vmatpush1.bf16.xpose.msra.mxu0 %v571
        %591 = vmatprep.subr.bf16.mxu0 0
        %592 = vmatpush1.bf16.xpose.msra.mxu0 %v570
        %593 = vmatprep.subr.bf16.mxu0 0
        %594 = vmatpush1.bf16.xpose.msra.mxu0 %v569
        %595 = vmatprep.subr.bf16.mxu0 0
        %596 = vmatpush1.bf16.xpose.msra.mxu0 %v568
        %597 = vmatprep.subr.bf16.mxu0 0
        %598 = vmatpush1.bf16.xpose.msra.mxu0 %v567
        %599 = vmatprep.subr.bf16.mxu0 0
        %600 = vmatpush2.bf16.xpose.msra.mxu0 0
        %601 = vmatprep.subr.bf16.mxu0 0
        %602 = vmatpush2.bf16.xpose.msra.mxu0 0
        %603 = vmatprep.subr.bf16.mxu0 0
        %604 = vmatpush2.bf16.xpose.msra.mxu0 0
        %605 = vmatprep.subr.bf16.mxu0 0
        %606 = vmatpush2.bf16.xpose.msra.mxu0 0
        %607 = vmatprep.subr.bf16.mxu0 0
        %608 = vmatpush2.bf16.xpose.msra.mxu0 0
        %609 = vmatprep.subr.bf16.mxu0 0
        %610 = vmatpush2.bf16.xpose.msra.mxu0 0
        %611 = vmatprep.subr.bf16.mxu0 0
        %612 = vmatpush2.bf16.xpose.msra.mxu0 0
        %613 = vmatprep.subr.bf16.mxu0 0
        %614 = vmatpush2.bf16.xpose.msra.mxu0 0
        %615 = vmatprep.mubr.bf16.mxu0 0
        %616 = vmatmul.mubr.bf16.gmra.mxu0 %v533
        %v617 = vpop.f32.mrf.mxu0
        %v618 = vadd.f32 0.0, %v617
        %v619 = vpop.f32.mrf.mxu0
        %v620 = vpop.f32.mrf.mxu0
        %v621 = vadd.f32 0.0, %v620
        %v622 = vpop.f32.mrf.mxu0
        %623 = vdwg.mxu0
        %p624 = scmp.lt.s32.totalorder %s26, 2
        // Predicated region
        $region53: #{tpu_custom_call.1} parent=35 // pred_check
          %p625 = pneg %p624
        $region54: #{tpu_custom_call.1} parent=35 // pred_check_branch
          %627 = sbr.rel (%p625) target = $region56
        $region55: #{tpu_custom_call.1} parent=35 // pred_region
          %s628 = smul.u32 %s27, 16
          %s629 = scalar_lea.vmem [#allocation3], %s628
          %v630 = vld [vmem:[%s629] sm:$0xff]
          %v631 = vld [vmem:[%s629 + $0x8] sm:$0xff]
          %632 = vmax.xlane.f32.xlu0 %v618
          %v633 = vpop.xlane.xlu0 %632
          %634 = vmax.xlane.f32.xlu0 %v621
          %v635 = vpop.xlane.xlu0 %634
          %v636 = vmax.f32 %v630, %v633
          %v637 = vmax.f32 %v631, %v635
          %v638 = vsub.f32 %v630, %v636
          %v639 = vsub.f32 %v631, %v637
          %v640 = vmul.f32 %v638, 1.442695
          %v641 = vpow.pop %v640
          %v642 = vmul.f32 %v639, 1.442695
          %v643 = vpow.pop %v642
          %s644 = scalar_lea.vmem [#allocation4], %s628
          %v645 = vld [vmem:[%s644] sm:$0xff]
          %v646 = vld [vmem:[%s644 + $0x8] sm:$0xff]
          %v647 = vmul.f32 %v641, %v645
          %v648 = vmul.f32 %v643, %v646
          %650 = vset.pattern.permute.xlu0 0
          %651 = vperm.xlu0 %650, %v636
          %v652 = vpop.permute.xlu0 %651
          %655 = vset.pattern.permute.xlu0 0
          %656 = vperm.xlu0 %655, %v637
          %v657 = vpop.permute.xlu0 %656
          %v659 = vsub.f32 %v618, %v652
          %v660 = vsub.f32 %v621, %v657
          %v661 = vmul.f32 %v659, 1.442695
          %v662 = vpow.pop %v661
          %v663 = vmul.f32 %v660, 1.442695
          %v664 = vpow.pop %v663
          %665 = vadd.xlane.f32.xlu0 %v662
          %v666 = vpop.xlane.xlu0 %665
          %667 = vadd.xlane.f32.xlu0 %v664
          %v668 = vpop.xlane.xlu0 %667
          %v669 = vadd.f32 %v647, %v666
          %v670 = vadd.f32 %v648, %v668
          %vm671 = vcmask 7168
          %672 = vst.msk [vmem:[%s644] sm:$0xff] %vm671, %v669
          %673 = vst.msk [vmem:[%s644 + $0x8] sm:$0xff] %vm671, %v670
          %674 = vst.msk [vmem:[%s629] sm:$0xff] %vm671, %v636
          %675 = vst.msk [vmem:[%s629 + $0x8] sm:$0xff] %vm671, %v637
        $region56: #{tpu_custom_call.1} parent=35 // pred_fallthru
          _
        %p676 = scmp.eq.s32.totalorder %s26, 2
        // Predicated region
        $region57: #{tpu_custom_call.1} parent=35 // pred_check
          %p677 = pneg %p676
        $region58: #{tpu_custom_call.1} parent=35 // pred_check_branch
          %679 = sbr.rel (%p677) target = $region60
        $region59: #{tpu_custom_call.1} parent=35 // pred_region
          %v680 = vlaneseq
          %v681 = vand.u32 %v680, 127
          %v682 = vadd.s32 %v681, 256
          %vm683 = vcmp.lt.s32.totalorder %v682, 300
          %v684 = vsel %vm683, %v618, -1e+30
          %v685 = vsel %vm683, %v621, -1e+30
          %s686 = smul.u32 %s27, 16
          %s687 = scalar_lea.vmem [#allocation3], %s686
          %v688 = vld [vmem:[%s687] sm:$0xff]
          %v689 = vld [vmem:[%s687 + $0x8] sm:$0xff]
          %690 = vmax.xlane.f32.xlu0 %v684
          %v691 = vpop.xlane.xlu0 %690
          %692 = vmax.xlane.f32.xlu0 %v685
          %v693 = vpop.xlane.xlu0 %692
          %v694 = vmax.f32 %v688, %v691
          %v695 = vmax.f32 %v689, %v693
          %v696 = vsub.f32 %v688, %v694
          %v697 = vsub.f32 %v689, %v695
          %v698 = vmul.f32 %v696, 1.442695
          %v699 = vpow.pop %v698
          %v700 = vmul.f32 %v697, 1.442695
          %v701 = vpow.pop %v700
          %s702 = scalar_lea.vmem [#allocation4], %s686
          %v703 = vld [vmem:[%s702] sm:$0xff]
          %v704 = vld [vmem:[%s702 + $0x8] sm:$0xff]
          %v705 = vmul.f32 %v699, %v703
          %v706 = vmul.f32 %v701, %v704
          %708 = vset.pattern.permute.xlu0 0
          %709 = vperm.xlu0 %708, %v694
          %v710 = vpop.permute.xlu0 %709
          %713 = vset.pattern.permute.xlu0 0
          %714 = vperm.xlu0 %713, %v695
          %v715 = vpop.permute.xlu0 %714
          %v717 = vsub.f32 %v684, %v710
          %v718 = vsub.f32 %v685, %v715
          %v719 = vmul.f32 %v717, 1.442695
          %v720 = vpow.pop %v719
          %v721 = vmul.f32 %v718, 1.442695
          %v722 = vpow.pop %v721
          %723 = vadd.xlane.f32.xlu0 %v720
          %v724 = vpop.xlane.xlu0 %723
          %725 = vadd.xlane.f32.xlu0 %v722
          %v726 = vpop.xlane.xlu0 %725
          %v727 = vadd.f32 %v705, %v724
          %v728 = vadd.f32 %v706, %v726
          %vm729 = vcmask 7168
          %730 = vst.msk [vmem:[%s702] sm:$0xff] %vm729, %v727
          %731 = vst.msk [vmem:[%s702 + $0x8] sm:$0xff] %vm729, %v728
          %732 = vst.msk [vmem:[%s687] sm:$0xff] %vm729, %v694
          %733 = vst.msk [vmem:[%s687 + $0x8] sm:$0xff] %vm729, %v695
        $region60: #{tpu_custom_call.1} parent=35 // pred_fallthru
          _
        %p734 = scmp.eq.s32.totalorder %s26, 3
        // Predicated region
        $region61: #{tpu_custom_call.1} parent=35 // pred_check
          %p735 = pneg %p734
        $region62: #{tpu_custom_call.1} parent=35 // pred_check_branch
          %737 = sbr.rel (%p735) target = $region64
        $region63: #{tpu_custom_call.1} parent=35 // pred_region
          %s738 = smul.u32 %s27, 16
          %s739 = scalar_lea.vmem [#allocation3], %s738
          %v740 = vld [vmem:[%s739] sm:$0xff]
          %v741 = vld [vmem:[%s739 + $0x8] sm:$0xff]
          %s742 = scalar_lea.vmem [#allocation4], %s738
          %v743 = vld [vmem:[%s742] sm:$0xff]
          %v744 = vld [vmem:[%s742 + $0x8] sm:$0xff]
          %v745 = vlog2.pop %v743
          %v746 = vmul.f32 %v745, 0.6931472
          %v747 = vlog2.pop %v744
          %v748 = vmul.f32 %v747, 0.6931472
          %v749 = vadd.f32 %v740, %v746
          %v750 = vadd.f32 %v741, %v748
          %vm751 = vcmask 7168
          %752 = vst.msk [vmem:[%s739] sm:$0xff] %vm751, %v749
          %753 = vst.msk [vmem:[%s739 + $0x8] sm:$0xff] %vm751, %v750
        $region64: #{tpu_custom_call.1} parent=35 // pred_fallthru
          _
        %p754 = scmp.ge.s32.totalorder %s26, 3
        // Predicated region
        $region65: #{tpu_custom_call.1} parent=35 // pred_check
          %p755 = pneg %p754
        $region66: #{tpu_custom_call.1} parent=35 // pred_check_branch
          %757 = sbr.rel (%p755) target = $region68
        $region67: #{tpu_custom_call.1} parent=35 // pred_region
          %s758 = smul.u32 %s27, 16
          %s759 = scalar_lea.vmem [#allocation3], %s758
          %v760 = vld [vmem:[%s759] sm:$0xff]
          %v761 = vld [vmem:[%s759 + $0x8] sm:$0xff]
          %763 = vset.pattern.permute.xlu0 0
          %764 = vperm.xlu0 %763, %v760
          %v765 = vpop.permute.xlu0 %764
          %768 = vset.pattern.permute.xlu0 0
          %769 = vperm.xlu0 %768, %v761
          %v770 = vpop.permute.xlu0 %769
          %v772 = vsub.f32 %v618, %v765
          %v773 = vsub.f32 %v621, %v770
          %774 = vst [vmem:[%s336] sm:$0xff] %v772
          %775 = vst [vmem:[%s336 + $0x8] sm:$0xff] %v773
        $region68: #{tpu_custom_call.1} parent=35 // pred_fallthru
          _
        %s776 = sand.u32 %s178, 1
        %s777 = scalar_lea.sflag [#allocation7], %s776
        %s778 = sand.u32 %s178, 1
        %s779 = smul.addr %s778, 16
        %s780 = scalar_lea.vmem [#allocation11], %s779
        // Predicated region
        $region69: #{tpu_custom_call.1} parent=35 // pred_check
          %p781 = pneg %p188
        $region70: #{tpu_custom_call.1} parent=35 // pred_check_branch
          %783 = sbr.rel (%p781) target = $region72
        $region71: #{tpu_custom_call.1} parent=35 // pred_region
          %p784 = scmp.lt.s32.totalorder %s26, 3
          %s785 = scalar_select %p784, 0, %s27
          %s786 = ssub.s32 %s26, 3
          %p787 = scmp.gt.s32.totalorder %s786, 0
          %s788 = scalar_select %p787, %s786, 0
          %s789 = smul.u32 2, %s785
          %s791 = ssub.s32 256, 256
          %792 = vsyncadd %s777, %s791
          %s793 = smul.addr %s789, 3
          %s794 = sadd.s32 %s788, %s793
          %s795 = smul.addr %s794, 128
          %s796 = scalar_lea.hbm %s4, %s795
          %s797 = sshll.u32 %s780, 4
          %s798 = int_to_ptr.vmem [resolvable:$true] %s797
          %803 = dma.vmem_to_hbm [thread:$0]  %s798, 256, %s796, %s777, 128, 384, 8
        $region72: #{tpu_custom_call.1} parent=35 // pred_fallthru
          _
      $region36: #{tpu_custom_call.1} parent=5 // pred_fallthru
        _
      %p804 = scmp.le.s32.totalorder 2, %s17
      // Predicated region
      $region73: #{tpu_custom_call.1} parent=5 // pred_check
        %p805 = pneg %p804
      $region74: #{tpu_custom_call.1} parent=5 // pred_check_branch
        %807 = sbr.rel (%p805) target = $region76
      $region75: #{tpu_custom_call.1} parent=5 // pred_region
        %s808 = ssub.s32 %s17, 2
        // Predicated region
        $region77: #{tpu_custom_call.1} parent=75 // pred_check
          %p809 = pneg %p194
        $region78: #{tpu_custom_call.1} parent=75 // pred_check_branch
          %811 = sbr.rel (%p809) target = $region80
        $region79: #{tpu_custom_call.1} parent=75 // pred_region
          %s812 = sand.u32 %s179, 1
          %s813 = scalar_lea.sflag [#allocation7], %s812
          %s814 = sand.u32 %s179, 1
          %s815 = smul.addr %s814, 16
          %s816 = scalar_lea.vmem [#allocation11], %s815
          %817 = dma.done %s813, 256
        $region80: #{tpu_custom_call.1} parent=75 // pred_fallthru
          _
      $region76: #{tpu_custom_call.1} parent=5 // pred_fallthru
        _
    $region6: #{tpu_custom_call.1} parent=1 // loop_footer
      %s21 = sadd.s32 1, %s17
    $region7: #{tpu_custom_call.1} parent=1 // loop_footer_branch
      %16 = sbr.rel target = $region3
    $region8: #{tpu_custom_call.1} parent=1 // loop_exit
      _
    %818 = vsyncpa [#allocation6], 1
    %s819 = scalar_lea.sflag [#allocation6], 1
    %820 = vsyncpa %s819, 1
    %821 = vsyncpa [#allocation9], 1
    %822 = vsyncpa [#allocation7], 1
    %s823 = scalar_lea.sflag [#allocation7], 1
    %824 = vsyncpa %s823, 1

</llo_original>
